<compile_context>
chip_gen: v7x
topology: tpu7x:2x2x1
jax: 0.10.0
libtpu: 0.0.40
codegen_flags: <defaults>
</compile_context>

<pallas_src>
import jax
import jax.numpy as jnp
from jax.experimental import pallas as pl
from jax.experimental.pallas import tpu as pltpu


def _model_kernel(x_ref, w1blk_ref, b1_ref, w2_ref, b2_ref, o_ref):
    # x_ref:     (S, BC*F)        input, lane axis = (b,c,f) flattened
    # w1blk_ref: (BC*F, BC*F)     kron(I_BC, W1^T)  (hoisted, block-diagonal)
    # b1_ref:    (1, BC*F)        fc_1 bias tiled per (b, c) slice
    # w2_ref:    (O, S)           fc_2 weight, used as-is (permute fused)
    # b2_ref:    (O, BC*F)        fc_2 bias pre-broadcast (lane-dense)
    # o_ref:     (O, BC*F)        o_ref[o, bc*F + g] == result[b, c, g, o]

    # fc_1 over all (b, c) slices in one MXU pass, then bias + ReLU (one VPU pass).
    z = jnp.dot(x_ref[...], w1blk_ref[...], preferred_element_type=jnp.float32)
    z = jnp.maximum(z + b1_ref[...], 0.0)                      # (S, BC*F)

    # permute([0,1,3,2]) + fc_2 fused: contracting the S (row) axis of z with
    # W2 is exactly the post-permute linear.  Single lane-dense store.
    o = jnp.dot(w2_ref[...], z, preferred_element_type=jnp.float32)
    o_ref[...] = jnp.maximum(o + b2_ref[...], 0.0).astype(o_ref.dtype)


def prepare_params(w1, b1, w2, b2, B, C):
    """One-time (hoisted) parameter preparation — NOT in the per-call path.

    w1: (F, F)  fc_1 weight (out, in);  b1: (F,)
    w2: (O, S)  fc_2 weight (out, in);  b2: (O,)
    """
    F_out, F_in = w1.shape
    O, S_in = w2.shape
    BC = B * C
    # fc_1 as one lane-dense matmul over all (b, c): block-diagonal W1^T.
    w1_blk = jnp.kron(jnp.eye(BC, dtype=w1.dtype), w1.T)       # (BC*F_in, BC*F_out)
    b1_row = jnp.tile(b1, BC).reshape(1, BC * F_out)           # (1, BC*F)
    # fc_2 bias pre-broadcast so the kernel add is a plain lane-dense VPU op.
    b2_full = jnp.broadcast_to(b2.reshape(O, 1), (O, BC * F_out))
    return w1_blk, b1_row, w2, b2_full


@jax.jit
def model_forward(x, w1_blk, b1_row, w2, b2_full):
    """x: (B, C, S, F) float32 with prepared params from prepare_params().

    Returns (B, C, F, O) == relu(fc_2(permute(relu(fc_1(x)), [0,1,3,2]))).
    """
    B, C, S, F = x.shape
    O, S_in = w2.shape
    # permute([0,1,3,2]) makes S the contracted axis of fc_2.
    assert S == S_in, "seq length must equal fc_2 in-features (10)"
    BC = B * C
    BCF = BC * F

    # (B, C, S, F) -> (S, BC*F): column index = (b*C + c)*F + f  (lane-dense).
    xf = jnp.transpose(x, (2, 0, 1, 3)).reshape(S, BCF)

    itemsize = 4
    cost = pl.CostEstimate(
        flops=2 * S * BCF * BCF + 2 * O * S * BCF,
        transcendentals=0,
        bytes_accessed=itemsize * (S * BCF + BCF * BCF + BCF + O * S
                                   + O * BCF + O * BCF),
    )

    vmem = pltpu.MemorySpace.VMEM
    out2d = pl.pallas_call(
        _model_kernel,
        out_shape=jax.ShapeDtypeStruct((O, BCF), x.dtype),
        in_specs=[pl.BlockSpec(memory_space=vmem)] * 5,   # whole arrays, no grid
        out_specs=pl.BlockSpec(memory_space=vmem),
        cost_estimate=cost,
    )(xf, w1_blk, b1_row, w2, b2_full)

    # out2d[o, (b*C+c)*F + g] == result[b, c, g, o]; cheap layout fix in XLA.
    return jnp.transpose(out2d.reshape(O, B, C, F), (1, 2, 3, 0))


def _reference(x, w1, b1, w2, b2):
    z = jnp.maximum(jnp.einsum("bcsf,gf->bcsg", x, w1) + b1, 0.0)
    z = jnp.transpose(z, (0, 1, 3, 2))                 # permute [0,1,3,2]
    o = jnp.maximum(jnp.einsum("bcfs,os->bcfo", z, w2) + b2, 0.0)
    return o


if __name__ == "__main__":
    key = jax.random.PRNGKey(0)
    kx, k1, k2, k3, k4 = jax.random.split(key, 5)

    B, C, S, F, O = 2, 4, 10, 10, 2
    x = jax.random.normal(kx, (B, C, S, F), dtype=jnp.float32)

    # Deterministic parameter init (PyTorch-Linear-like uniform bounds).
    bound1 = 1.0 / jnp.sqrt(jnp.float32(F))
    w1 = jax.random.uniform(k1, (F, F), jnp.float32, -bound1, bound1)   # fc_1 (out, in)
    b1 = jax.random.uniform(k2, (F,), jnp.float32, -bound1, bound1)
    bound2 = 1.0 / jnp.sqrt(jnp.float32(F))
    w2 = jax.random.uniform(k3, (O, F), jnp.float32, -bound2, bound2)   # fc_2 (out, in)
    b2 = jax.random.uniform(k4, (O,), jnp.float32, -bound2, bound2)

    # Hoisted once — never in the per-call hot path.
    w1_blk, b1_row, w2_p, b2_full = prepare_params(w1, b1, w2, b2, B, C)

    out = model_forward(x, w1_blk, b1_row, w2_p, b2_full)
    jax.block_until_ready(out)

    ref = _reference(x, w1, b1, w2, b2)
    assert out.shape == (B, C, F, O), out.shape
    assert jnp.allclose(out, ref, atol=1e-5, rtol=1e-5), \
        float(jnp.max(jnp.abs(out - ref)))

    print("KERNEL_OK")
</pallas_src>

<mosaic_0001>
module attributes {stable_mosaic.version = 11 : i64} {
  func.func @_model_kernel(%arg0: memref<10x80xf32, #tpu.memory_space<vmem>>, %arg1: memref<80x80xf32, #tpu.memory_space<vmem>>, %arg2: memref<1x80xf32, #tpu.memory_space<vmem>>, %arg3: memref<2x10xf32, #tpu.memory_space<vmem>>, %arg4: memref<2x80xf32, #tpu.memory_space<vmem>>, %arg5: memref<2x80xf32, #tpu.memory_space<vmem>>) attributes {dimension_semantics = [], scalar_prefetch = 0 : i64, scratch_operands = 0 : i64, tpu.core_type = #tpu.core_type<tc>} {
    %c0 = arith.constant 0 : index
    %c0_0 = arith.constant 0 : index
    %0 = vector.load %arg0[%c0, %c0_0] : memref<10x80xf32, #tpu.memory_space<vmem>>, vector<10x80xf32>
    %c0_1 = arith.constant 0 : index
    %c0_2 = arith.constant 0 : index
    %1 = vector.load %arg1[%c0_1, %c0_2] : memref<80x80xf32, #tpu.memory_space<vmem>>, vector<80x80xf32>
    %cst = arith.constant dense<0.000000e+00> : vector<10x80xf32>
    %2 = tpu.matmul %0, %1, %cst {dimension_numbers = #tpu.dot_dimension_numbers<[1], [0], [0], [1], [0, 0, 1, 1], [], []>} : vector<10x80xf32>, vector<80x80xf32>, vector<10x80xf32> -> vector<10x80xf32>
    %c0_3 = arith.constant 0 : index
    %c0_4 = arith.constant 0 : index
    %3 = vector.load %arg2[%c0_3, %c0_4] : memref<1x80xf32, #tpu.memory_space<vmem>>, vector<1x80xf32>
    %4 = vector.broadcast %3 : vector<1x80xf32> to vector<10x80xf32>
    %5 = arith.addf %2, %4 : vector<10x80xf32>
    %cst_5 = arith.constant 0.000000e+00 : f32
    %6 = vector.broadcast %cst_5 : f32 to vector<10x80xf32>
    %7 = arith.maximumf %5, %6 : vector<10x80xf32>
    %c0_6 = arith.constant 0 : index
    %c0_7 = arith.constant 0 : index
    %8 = vector.load %arg3[%c0_6, %c0_7] : memref<2x10xf32, #tpu.memory_space<vmem>>, vector<2x10xf32>
    %cst_8 = arith.constant dense<0.000000e+00> : vector<2x80xf32>
    %9 = tpu.matmul %8, %7, %cst_8 {dimension_numbers = #tpu.dot_dimension_numbers<[1], [0], [0], [1], [0, 0, 1, 1], [], []>} : vector<2x10xf32>, vector<10x80xf32>, vector<2x80xf32> -> vector<2x80xf32>
    %c0_9 = arith.constant 0 : index
    %c0_10 = arith.constant 0 : index
    %10 = vector.load %arg4[%c0_9, %c0_10] : memref<2x80xf32, #tpu.memory_space<vmem>>, vector<2x80xf32>
    %11 = arith.addf %9, %10 : vector<2x80xf32>
    %cst_11 = arith.constant 0.000000e+00 : f32
    %12 = vector.broadcast %cst_11 : f32 to vector<2x80xf32>
    %13 = arith.maximumf %11, %12 : vector<2x80xf32>
    %c0_12 = arith.constant 0 : index
    %c0_13 = arith.constant 0 : index
    %14 = vector.load %arg5[%c0_12, %c0_13] : memref<2x80xf32, #tpu.memory_space<vmem>>, vector<2x80xf32>
    tpu.vector_store %arg5[%c0_12, %c0_13], %13 {strides = array<i32>} : memref<2x80xf32, #tpu.memory_space<vmem>>, vector<2x80xf32>,
    return
  }
}

</mosaic_0001>

<llo_original>
// kernel: model_forward.1
$region0: #{model_forward.1}
  #allocation0 [shape = 'u32[]', space=smem, size = 0x4, offset = 0x4, fixed_abs, tag = 'smem constant byte address 0x4 - core index']
  #allocation1 [shape = 'u32[144,128]{1,0:T(1,128)}', space=vmem, size = 0x12000, scoped, tag = 'internal scratch']
  %s0 = inlined_call_operand.vmem [shape: f32[10,80], index: 0, kind: input, shape index: {}]
  %s1 = inlined_call_operand.vmem [shape: f32[80,80], index: 1, kind: input, shape index: {}]
  %s2 = inlined_call_operand.vmem [shape: f32[1,80], index: 2, kind: input, shape index: {}]
  %s3 = inlined_call_operand.vmem [shape: f32[2,10], index: 3, kind: input, shape index: {}]
  %s4 = inlined_call_operand.vmem [shape: f32[2,80], index: 4, kind: input, shape index: {}]
  %s5 = inlined_call_operand.vmem [shape: f32[2,80], index: 5, kind: output, shape index: {}]
  %s6 = sld [smem:[#allocation0]]
  $region30: #{model_forward.1} parent=0
    _
  %s8 = ssub.s32 1, %s6
  %s9 = scalar_select 0, %s8, %s6
  // Predicated region
  $region2: #{model_forward.1} parent=0 // pred_check
    _
  $region3: #{model_forward.1} parent=0 // pred_check_branch
    %11 = sbr.rel (0) target = $region5
  $region4: #{model_forward.1} parent=0 // pred_region
    _
  $region5: #{model_forward.1} parent=0 // pred_fallthru
    _
  // Predicated region
  $region6: #{model_forward.1} parent=0 // pred_check
    _
  $region7: #{model_forward.1} parent=0 // pred_check_branch
    %13 = sbr.rel (0) target = $region9
  $region8: #{model_forward.1} parent=0 // pred_region
    _
  $region9: #{model_forward.1} parent=0 // pred_fallthru
    _
  // Predicated region
  $region10: #{model_forward.1} parent=0 // pred_check
    _
  $region11: #{model_forward.1} parent=0 // pred_check_branch
    %15 = sbr.rel (0) target = $region13
  $region12: #{model_forward.1} parent=0 // pred_region
    _
  $region13: #{model_forward.1} parent=0 // pred_fallthru
    _
  // Predicated region
  $region14: #{model_forward.1} parent=0 // pred_check
    _
  $region15: #{model_forward.1} parent=0 // pred_check_branch
    %17 = sbr.rel (0) target = $region17
  $region16: #{model_forward.1} parent=0 // pred_region
    _
  $region17: #{model_forward.1} parent=0 // pred_fallthru
    _
  // Predicated region
  $region18: #{model_forward.1} parent=0 // pred_check
    _
  $region19: #{model_forward.1} parent=0 // pred_check_branch
    %19 = sbr.rel (0) target = $region21
  $region20: #{model_forward.1} parent=0 // pred_region
    _
  $region21: #{model_forward.1} parent=0 // pred_fallthru
    _
  %v20 = vld [vmem:[%s0] sm:$0xff]
  %v21 = vld [vmem:[%s0 + $0x8] sm:$0x3]
  %v22 = vld [vmem:[%s1] sm:$0xff]
  %v23 = vld [vmem:[%s1 + $0x8] sm:$0xff]
  %v24 = vld [vmem:[%s1 + $0x10] sm:$0xff]
  %v25 = vld [vmem:[%s1 + $0x18] sm:$0xff]
  %v26 = vld [vmem:[%s1 + $0x20] sm:$0xff]
  %v27 = vld [vmem:[%s1 + $0x28] sm:$0xff]
  %v28 = vld [vmem:[%s1 + $0x30] sm:$0xff]
  %v29 = vld [vmem:[%s1 + $0x38] sm:$0xff]
  %v30 = vld [vmem:[%s1 + $0x40] sm:$0xff]
  %v31 = vld [vmem:[%s1 + $0x48] sm:$0xff]
  %v32 = vld [vmem:[%s2] sm:$0x1]
  %v34 = vlaneseq
  %v35 = vshrl.u32 %v34, 7
  %v36 = vsub.s32 0, %v35
  %v37 = vrot.slane %v32, %v36
  %vm39 = vcmask 654336
  %v41 = vsel %vm39, %v20, 0
  %v44 = vsel %vm39, %v21, 0
  %46 = vmatprep.subr.mxu0 0.0
  %47 = vmatpush1.msra.mxu0 %v22
  %48 = vmatprep.subr.mxu0 0.0
  %49 = vmatpush1.msra.mxu0 %v23
  %50 = vmatprep.subr.mxu0 0.0
  %51 = vmatpush1.msra.mxu0 %v24
  %52 = vmatprep.subr.mxu0 0.0
  %53 = vmatpush1.msra.mxu0 %v25
  %54 = vmatprep.subr.mxu0 0.0
  %55 = vmatpush1.msra.mxu0 %v26
  %56 = vmatprep.subr.mxu0 0.0
  %57 = vmatpush1.msra.mxu0 %v27
  %58 = vmatprep.subr.mxu0 0.0
  %59 = vmatpush1.msra.mxu0 %v28
  %60 = vmatprep.subr.mxu0 0.0
  %61 = vmatpush1.msra.mxu0 %v29
  %62 = vmatprep.subr.mxu0 0.0
  %63 = vmatpush1.msra.mxu0 %v30
  %64 = vmatprep.subr.mxu0 0.0
  %65 = vmatpush1.msra.mxu0 %v31
  %66 = vmatprep.subr.mxu0 0.0
  %67 = vmatpush1.msra.mxu0 0.0
  %68 = vmatprep.subr.mxu0 0.0
  %69 = vmatpush1.msra.mxu0 0.0
  %70 = vmatprep.subr.mxu0 0.0
  %71 = vmatpush1.msra.mxu0 0.0
  %72 = vmatprep.subr.mxu0 0.0
  %73 = vmatpush1.msra.mxu0 0.0
  %74 = vmatprep.subr.mxu0 0.0
  %75 = vmatpush1.msra.mxu0 0.0
  %76 = vmatprep.subr.mxu0 0.0
  %77 = vmatpush1.msra.mxu0 0.0
  %78 = vmatprep.subr.mxu0 0.0
  %79 = vmatpush1.msra.mxu0 0.0
  %80 = vmatprep.subr.mxu0 0.0
  %81 = vmatpush1.msra.mxu0 0.0
  %82 = vmatprep.subr.mxu0 0.0
  %83 = vmatpush1.msra.mxu0 0.0
  %84 = vmatprep.subr.mxu0 0.0
  %85 = vmatpush1.msra.mxu0 0.0
  %86 = vmatprep.subr.mxu0 0.0
  %87 = vmatpush1.msra.mxu0 0.0
  %88 = vmatprep.subr.mxu0 0.0
  %89 = vmatpush1.msra.mxu0 0.0
  %90 = vmatprep.subr.mxu0 0.0
  %91 = vmatpush1.msra.mxu0 0.0
  %92 = vmatprep.subr.mxu0 0.0
  %93 = vmatpush1.msra.mxu0 0.0
  %94 = vmatprep.subr.mxu0 0.0
  %95 = vmatpush1.msra.mxu0 0.0
  %96 = vmatprep.subr.mxu0 0.0
  %97 = vmatpush1.msra.mxu0 0.0
  %98 = vmatprep.subr.mxu0 0.0
  %99 = vmatpush1.msra.mxu0 0.0
  %100 = vmatprep.subr.mxu0 0.0
  %101 = vmatpush1.msra.mxu0 0.0
  %102 = vmatprep.subr.mxu0 0.0
  %103 = vmatpush1.msra.mxu0 0.0
  %104 = vmatprep.subr.mxu0 0.0
  %105 = vmatpush1.msra.mxu0 0.0
  %106 = vmatprep.subr.mxu0 0.0
  %107 = vmatpush1.msra.mxu0 0.0
  %108 = vmatprep.subr.mxu0 0.0
  %109 = vmatpush1.msra.mxu0 0.0
  %110 = vmatprep.mubr.f32.mxu0 0.0
  %111 = vmatmul.mubr.f32.gmra.mrb[0].mxu0 %v41
  %v112 = vpop.f32.mrb[0].mxu0
  %v113 = vadd.f32 %v37, %v112
  %v114 = vpop.f32.mrb[0].mxu0
  %115 = vmatprep.mubr.f32.mxu0 0.0
  %116 = vmatmul.mubr.f32.gmra.mrb[0].mxu0 %v44
  %v117 = vpop.f32.mrb[0].mxu0
  %v118 = vadd.f32 %v37, %v117
  %v119 = vpop.f32.mrb[0].mxu0
  %120 = vdwg.mxu0
  %v121 = vmax.f32 %v113, 0.0
  %v122 = vmax.f32 %v118, 0.0
  %v123 = vld [vmem:[%s3] sm:$0x3]
  %v124 = vld [vmem:[%s4] sm:$0x3]
  %vm125 = vcmask 80896
  %v127 = vsel %vm125, %v123, 0
  %vm129 = vcmask 1041408
  %v131 = vsel %vm129, %v122, 0
  %133 = vmatprep.subr.mxu0 0.0
  %134 = vmatpush1.msra.mxu0 %v121
  %135 = vmatprep.subr.mxu0 0.0
  %136 = vmatpush1.msra.mxu0 %v131
  %137 = vmatprep.subr.mxu0 0.0
  %138 = vmatpush1.msra.mxu0 0.0
  %139 = vmatprep.subr.mxu0 0.0
  %140 = vmatpush1.msra.mxu0 0.0
  %141 = vmatprep.subr.mxu0 0.0
  %142 = vmatpush1.msra.mxu0 0.0
  %143 = vmatprep.subr.mxu0 0.0
  %144 = vmatpush1.msra.mxu0 0.0
  %145 = vmatprep.subr.mxu0 0.0
  %146 = vmatpush1.msra.mxu0 0.0
  %147 = vmatprep.subr.mxu0 0.0
  %148 = vmatpush1.msra.mxu0 0.0
  %149 = vmatprep.subr.mxu0 0.0
  %150 = vmatpush1.msra.mxu0 0.0
  %151 = vmatprep.subr.mxu0 0.0
  %152 = vmatpush1.msra.mxu0 0.0
  %153 = vmatprep.subr.mxu0 0.0
  %154 = vmatpush1.msra.mxu0 0.0
  %155 = vmatprep.subr.mxu0 0.0
  %156 = vmatpush1.msra.mxu0 0.0
  %157 = vmatprep.subr.mxu0 0.0
  %158 = vmatpush1.msra.mxu0 0.0
  %159 = vmatprep.subr.mxu0 0.0
  %160 = vmatpush1.msra.mxu0 0.0
  %161 = vmatprep.subr.mxu0 0.0
  %162 = vmatpush1.msra.mxu0 0.0
  %163 = vmatprep.subr.mxu0 0.0
  %164 = vmatpush1.msra.mxu0 0.0
  %165 = vmatprep.subr.mxu0 0.0
  %166 = vmatpush1.msra.mxu0 0.0
  %167 = vmatprep.subr.mxu0 0.0
  %168 = vmatpush1.msra.mxu0 0.0
  %169 = vmatprep.subr.mxu0 0.0
  %170 = vmatpush1.msra.mxu0 0.0
  %171 = vmatprep.subr.mxu0 0.0
  %172 = vmatpush1.msra.mxu0 0.0
  %173 = vmatprep.subr.mxu0 0.0
  %174 = vmatpush1.msra.mxu0 0.0
  %175 = vmatprep.subr.mxu0 0.0
  %176 = vmatpush1.msra.mxu0 0.0
  %177 = vmatprep.subr.mxu0 0.0
  %178 = vmatpush1.msra.mxu0 0.0
  %179 = vmatprep.subr.mxu0 0.0
  %180 = vmatpush1.msra.mxu0 0.0
  %181 = vmatprep.subr.mxu0 0.0
  %182 = vmatpush1.msra.mxu0 0.0
  %183 = vmatprep.subr.mxu0 0.0
  %184 = vmatpush1.msra.mxu0 0.0
  %185 = vmatprep.subr.mxu0 0.0
  %186 = vmatpush1.msra.mxu0 0.0
  %187 = vmatprep.subr.mxu0 0.0
  %188 = vmatpush1.msra.mxu0 0.0
  %189 = vmatprep.subr.mxu0 0.0
  %190 = vmatpush1.msra.mxu0 0.0
  %191 = vmatprep.subr.mxu0 0.0
  %192 = vmatpush1.msra.mxu0 0.0
  %193 = vmatprep.subr.mxu0 0.0
  %194 = vmatpush1.msra.mxu0 0.0
  %195 = vmatprep.subr.mxu0 0.0
  %196 = vmatpush1.msra.mxu0 0.0
  %197 = vmatprep.mubr.f32.mxu0 0.0
  %198 = vmatmul.mubr.f32.gmra.mrb[0].mxu0 %v127
  %v199 = vpop.f32.mrb[0].mxu0
  %v200 = vadd.f32 %v124, %v199
  %v201 = vpop.f32.mrb[0].mxu0
  %202 = vdwg.mxu0
  %v203 = vmax.f32 %v200, 0.0
  %vm204 = vcmask 648192
  %205 = vst.msk [vmem:[%s5] sm:$0x3] %vm204, %v203
  // Predicated region
  $region22: #{model_forward.1} parent=0 // pred_check
    _
  $region23: #{model_forward.1} parent=0 // pred_check_branch
    %207 = sbr.rel (0) target = $region25
  $region24: #{model_forward.1} parent=0 // pred_region
    _
  $region25: #{model_forward.1} parent=0 // pred_fallthru
    _
  // Predicated region
  $region26: #{model_forward.1} parent=0 // pred_check
    _
  $region27: #{model_forward.1} parent=0 // pred_check_branch
    %209 = sbr.rel (0) target = $region29
  $region28: #{model_forward.1} parent=0 // pred_region
    _
  $region29: #{model_forward.1} parent=0 // pred_fallthru
    _

</llo_original>
